<compile_context>
chip_gen: v7x
topology: tpu7x:2x2x1
jax: 0.10.0
libtpu: 0.0.40
codegen_flags: <defaults>
</compile_context>

<pallas_src>
import functools

import jax
import jax.numpy as jnp
from jax.experimental import pallas as pl
from jax.experimental.pallas import tpu as pltpu


def _ln2d_kernel_3d(x_ref, w_ref, b_ref, o_ref, *, eps, inv_c):
    """x_ref: (1, C, THW); w_ref/b_ref: (C, 1); o_ref: (1, C, THW). Used for C >= 8."""
    x = x_ref[0].astype(jnp.float32)                        # (C, THW)
    s = jnp.sum(x, axis=0, keepdims=True)                   # (1, THW)
    ss = jnp.sum(x * x, axis=0, keepdims=True)              # (1, THW)
    mu = s * inv_c
    var = jnp.maximum(ss * inv_c - mu * mu, 0.0)            # guard cancellation
    inv = jax.lax.rsqrt(var + eps)                          # (1, THW)
    w = w_ref[...].astype(jnp.float32)                      # (C, 1)
    b = b_ref[...].astype(jnp.float32)                      # (C, 1)
    o_ref[0] = (w * ((x - mu) * inv) + b).astype(o_ref.dtype)


def _ln2d_kernel_4d(x_ref, w_ref, b_ref, o_ref, *, eps, inv_c):
    """x_ref: (1, C, St, 128); w_ref/b_ref: (C, 1, 1). Used for C < 8 so each channel
    occupies full (St, 128) vreg tiles (no sublane padding), reduction over C is
    plain cross-tile VALU adds."""
    x = x_ref[0].astype(jnp.float32)                        # (C, St, 128)
    s = jnp.sum(x, axis=0)                                  # (St, 128)
    ss = jnp.sum(x * x, axis=0)                             # (St, 128)
    mu = s * inv_c
    var = jnp.maximum(ss * inv_c - mu * mu, 0.0)
    inv = jax.lax.rsqrt(var + eps)                          # (St, 128)
    w = w_ref[...].astype(jnp.float32)                      # (C, 1, 1)
    b = b_ref[...].astype(jnp.float32)
    y = (x - mu[None]) * inv[None]                          # (C, St, 128)
    o_ref[0] = (w * y + b).astype(o_ref.dtype)


def _vmem_limit_bytes():
    phys = 64 * 1024 * 1024          # conservative fallback (v7x physical VMEM)
    try:
        cap = getattr(pltpu.get_tpu_info(), "vmem_capacity_bytes", None)
        if isinstance(cap, int) and cap > 0:
            phys = cap
    except Exception:
        pass
    # Leave ~25% headroom; never request more than 96 MiB.
    return int(min(96 * 1024 * 1024, phys * 3 // 4))


def layernorm2d(x, weight, bias, eps=1e-6):
    """x: (N, C, H, W); weight, bias: (C,); returns (N, C, H, W)."""
    N, C, H, W = x.shape
    HW = H * W
    isz = jnp.dtype(x.dtype).itemsize

    vmem_limit = _vmem_limit_bytes()

    # --- choose a spatial tile, in rows of 128 lanes -------------------------
    # Pipelined VMEM per step ~ 2x double-buffered (in + out) blocks + f32 temps.
    bytes_per_row = C * 128 * (4 * isz + 4)
    st_budget = max(1, (vmem_limit * 3 // 5) // bytes_per_row)
    s_raw = pl.cdiv(HW, 128)
    use_4d = C < 8

    st = min(s_raw, st_budget, 2048)
    if use_4d and st < s_raw:
        # 4-D block (St, 128): St must be a multiple of 8 unless St == S.
        st = max(8, (st // 8) * 8)

    # Pad the flattened spatial dim so the tile divides it exactly (reduction is
    # over C, so zero-padded spatial columns never affect real outputs).
    s_pad = ((s_raw + st - 1) // st) * st
    hw_pad = s_pad * 128

    # v7x has 2 TensorCores per chip: prefer at least 2 grid steps when possible.
    if N * (s_pad // st) < 2:
        half = st // 2
        if half >= 1 and s_pad % half == 0 and ((not use_4d) or half % 8 == 0 or half == s_pad):
            st = half

    grid = (N, s_pad // st)

    x3 = x.reshape(N, C, HW)
    if hw_pad != HW:
        x3 = jnp.pad(x3, ((0, 0), (0, 0), (0, hw_pad - HW)))

    compiler_params = pltpu.CompilerParams(
        dimension_semantics=("parallel", "parallel"),
        vmem_limit_bytes=vmem_limit,
    )
    inv_c = 1.0 / C

    if use_4d:
        x4 = x3.reshape(N, C, s_pad, 128)
        out = pl.pallas_call(
            functools.partial(_ln2d_kernel_4d, eps=eps, inv_c=inv_c),
            out_shape=jax.ShapeDtypeStruct((N, C, s_pad, 128), x.dtype),
            grid_spec=pltpu.PrefetchScalarGridSpec(
                num_scalar_prefetch=0,
                grid=grid,
                in_specs=[
                    pl.BlockSpec((1, C, st, 128), lambda n, s: (n, 0, s, 0)),
                    pl.BlockSpec((C, 1, 1), lambda n, s: (0, 0, 0)),
                    pl.BlockSpec((C, 1, 1), lambda n, s: (0, 0, 0)),
                ],
                out_specs=pl.BlockSpec((1, C, st, 128), lambda n, s: (n, 0, s, 0)),
            ),
            compiler_params=compiler_params,
        )(x4, weight.reshape(C, 1, 1), bias.reshape(C, 1, 1))
        out = out.reshape(N, C, hw_pad)
    else:
        thw = st * 128
        out = pl.pallas_call(
            functools.partial(_ln2d_kernel_3d, eps=eps, inv_c=inv_c),
            out_shape=jax.ShapeDtypeStruct((N, C, hw_pad), x.dtype),
            grid_spec=pltpu.PrefetchScalarGridSpec(
                num_scalar_prefetch=0,
                grid=grid,
                in_specs=[
                    pl.BlockSpec((1, C, thw), lambda n, s: (n, 0, s)),
                    pl.BlockSpec((C, 1), lambda n, s: (0, 0)),
                    pl.BlockSpec((C, 1), lambda n, s: (0, 0)),
                ],
                out_specs=pl.BlockSpec((1, C, thw), lambda n, s: (n, 0, s)),
            ),
            compiler_params=compiler_params,
        )(x3, weight.reshape(C, 1), bias.reshape(C, 1))

    if hw_pad != HW:
        out = out[:, :, :HW]
    return out.reshape(N, C, H, W)


def _reference(x, weight, bias, eps):
    C = x.shape[1]
    mu = jnp.mean(x, axis=1, keepdims=True)
    var = jnp.mean((x - mu) ** 2, axis=1, keepdims=True)
    y = (x - mu) / jnp.sqrt(var + eps)
    return weight.reshape(1, C, 1, 1) * y + bias.reshape(1, C, 1, 1)


if __name__ == "__main__":
    key = jax.random.PRNGKey(0)
    k1, k2, k3, k4 = jax.random.split(key, 4)
    eps = 1e-6

    # Case 1: module-sized demo (small channel count -> 4-D small-C path).
    N, C, H, W = 2, 4, 16, 16
    x = jax.random.normal(k1, (N, C, H, W), dtype=jnp.float32)
    weight = 1.0 + 0.1 * jax.random.normal(k2, (C,), dtype=jnp.float32)
    bias = 0.1 * jax.random.normal(k3, (C,), dtype=jnp.float32)
    y = jax.block_until_ready(layernorm2d(x, weight, bias, eps))
    y_ref = _reference(x, weight, bias, eps)
    assert jnp.allclose(y, y_ref, atol=2e-5, rtol=2e-5), "mismatch (C=4 path)"

    # Case 2: C >= 8 and H*W not a multiple of 128 -> 3-D path + spatial padding.
    N2, C2, H2, W2 = 2, 16, 8, 8
    x2 = jax.random.normal(k4, (N2, C2, H2, W2), dtype=jnp.float32)
    weight2 = 1.0 + 0.05 * jnp.arange(C2, dtype=jnp.float32)
    bias2 = -0.25 + 0.02 * jnp.arange(C2, dtype=jnp.float32)
    y2 = jax.block_until_ready(layernorm2d(x2, weight2, bias2, eps))
    y2_ref = _reference(x2, weight2, bias2, eps)
    assert jnp.allclose(y2, y2_ref, atol=2e-5, rtol=2e-5), "mismatch (C=16 path)"

    print("KERNEL_OK")
</pallas_src>

<mosaic_0001>
module attributes {stable_mosaic.version = 11 : i64} {
  func.func @_ln2d_kernel_4d(%arg0: i32, %arg1: i32, %arg2: memref<1x4x2x128xf32, #tpu.memory_space<vmem>>, %arg3: memref<4x1x1xf32, #tpu.memory_space<vmem>>, %arg4: memref<4x1x1xf32, #tpu.memory_space<vmem>>, %arg5: memref<1x4x2x128xf32, #tpu.memory_space<vmem>>) attributes {dimension_semantics = [#tpu.dimension_semantics<parallel>, #tpu.dimension_semantics<parallel>], iteration_bounds = array<i64: 2, 1>, scalar_prefetch = 0 : i64, scratch_operands = 0 : i64, tpu.core_type = #tpu.core_type<tc>, window_params = [{transform_indices = @transform_0, window_bounds = array<i64: 1, 4, 2, 128>}, {pipeline_mode = #tpu.pipeline_mode<synchronous>, transform_indices = @transform_1, window_bounds = array<i64: 4, 1, 1>}, {pipeline_mode = #tpu.pipeline_mode<synchronous>, transform_indices = @transform_2, window_bounds = array<i64: 4, 1, 1>}, {transform_indices = @transform_3, window_bounds = array<i64: 1, 4, 2, 128>}]} {
    %c0 = arith.constant 0 : index
    %c0_0 = arith.constant 0 : index
    %c0_1 = arith.constant 0 : index
    %c0_2 = arith.constant 0 : index
    %0 = vector.load %arg2[%c0, %c0_0, %c0_1, %c0_2] : memref<1x4x2x128xf32, #tpu.memory_space<vmem>>, vector<1x4x2x128xf32>
    %1 = vector.shape_cast %0 : vector<1x4x2x128xf32> to vector<4x2x128xf32>
    %cst = arith.constant dense<0.000000e+00> : vector<2x128xf32>
    %2 = vector.multi_reduction <add>, %1, %cst [0] : vector<4x2x128xf32> to vector<2x128xf32>
    %3 = arith.mulf %1, %1 : vector<4x2x128xf32>
    %cst_3 = arith.constant dense<0.000000e+00> : vector<2x128xf32>
    %4 = vector.multi_reduction <add>, %3, %cst_3 [0] : vector<4x2x128xf32> to vector<2x128xf32>
    %cst_4 = arith.constant 2.500000e-01 : f32
    %5 = vector.broadcast %cst_4 : f32 to vector<2x128xf32>
    %6 = arith.mulf %2, %5 : vector<2x128xf32>
    %cst_5 = arith.constant 2.500000e-01 : f32
    %7 = vector.broadcast %cst_5 : f32 to vector<2x128xf32>
    %8 = arith.mulf %4, %7 : vector<2x128xf32>
    %9 = arith.mulf %6, %6 : vector<2x128xf32>
    %10 = arith.subf %8, %9 : vector<2x128xf32>
    %cst_6 = arith.constant 0.000000e+00 : f32
    %11 = vector.broadcast %cst_6 : f32 to vector<2x128xf32>
    %12 = arith.maximumf %10, %11 : vector<2x128xf32>
    %cst_7 = arith.constant 9.99999997E-7 : f32
    %13 = vector.broadcast %cst_7 : f32 to vector<2x128xf32>
    %14 = arith.addf %12, %13 : vector<2x128xf32>
    %15 = math.rsqrt %14 : vector<2x128xf32>
    %c0_8 = arith.constant 0 : index
    %c0_9 = arith.constant 0 : index
    %c0_10 = arith.constant 0 : index
    %16 = vector.load %arg3[%c0_8, %c0_9, %c0_10] : memref<4x1x1xf32, #tpu.memory_space<vmem>>, vector<4x1x1xf32>
    %c0_11 = arith.constant 0 : index
    %c0_12 = arith.constant 0 : index
    %c0_13 = arith.constant 0 : index
    %17 = vector.load %arg4[%c0_11, %c0_12, %c0_13] : memref<4x1x1xf32, #tpu.memory_space<vmem>>, vector<4x1x1xf32>
    %18 = vector.shape_cast %6 : vector<2x128xf32> to vector<1x2x128xf32>
    %19 = vector.broadcast %18 : vector<1x2x128xf32> to vector<4x2x128xf32>
    %20 = arith.subf %1, %19 : vector<4x2x128xf32>
    %21 = vector.shape_cast %15 : vector<2x128xf32> to vector<1x2x128xf32>
    %22 = vector.broadcast %21 : vector<1x2x128xf32> to vector<4x2x128xf32>
    %23 = arith.mulf %20, %22 : vector<4x2x128xf32>
    %24 = vector.broadcast %16 : vector<4x1x1xf32> to vector<4x2x128xf32>
    %25 = arith.mulf %24, %23 : vector<4x2x128xf32>
    %26 = vector.broadcast %17 : vector<4x1x1xf32> to vector<4x2x128xf32>
    %27 = arith.addf %25, %26 : vector<4x2x128xf32>
    %c0_14 = arith.constant 0 : index
    %c0_15 = arith.constant 0 : index
    %c0_16 = arith.constant 0 : index
    %c0_17 = arith.constant 0 : index
    %28 = vector.load %arg5[%c0_14, %c0_15, %c0_16, %c0_17] : memref<1x4x2x128xf32, #tpu.memory_space<vmem>>, vector<1x4x2x128xf32>
    %29 = vector.shape_cast %28 : vector<1x4x2x128xf32> to vector<4x2x128xf32>
    %30 = vector.shape_cast %27 : vector<4x2x128xf32> to vector<1x4x2x128xf32>
    tpu.vector_store %arg5[%c0_14, %c0_15, %c0_16, %c0_17], %30 {strides = array<i32>} : memref<1x4x2x128xf32, #tpu.memory_space<vmem>>, vector<1x4x2x128xf32>,
    return
  }
  func.func @transform_0(%arg0: i32, %arg1: i32) -> (i32, i32, i32, i32) {
    %c0_i32 = arith.constant 0 : i32
    %c0_i32_0 = arith.constant 0 : i32
    %c0_i32_1 = arith.constant 0 : i32
    return %arg0, %c0_i32, %arg1, %c0_i32_0 : i32, i32, i32, i32
  }
  func.func @transform_1(%arg0: i32, %arg1: i32) -> (i32, i32, i32) {
    %c0_i32 = arith.constant 0 : i32
    %c0_i32_0 = arith.constant 0 : i32
    %c0_i32_1 = arith.constant 0 : i32
    %c0_i32_2 = arith.constant 0 : i32
    return %c0_i32, %c0_i32_0, %c0_i32_1 : i32, i32, i32
  }
  func.func @transform_2(%arg0: i32, %arg1: i32) -> (i32, i32, i32) {
    %c0_i32 = arith.constant 0 : i32
    %c0_i32_0 = arith.constant 0 : i32
    %c0_i32_1 = arith.constant 0 : i32
    %c0_i32_2 = arith.constant 0 : i32
    return %c0_i32, %c0_i32_0, %c0_i32_1 : i32, i32, i32
  }
  func.func @transform_3(%arg0: i32, %arg1: i32) -> (i32, i32, i32, i32) {
    %c0_i32 = arith.constant 0 : i32
    %c0_i32_0 = arith.constant 0 : i32
    %c0_i32_1 = arith.constant 0 : i32
    return %arg0, %c0_i32, %arg1, %c0_i32_0 : i32, i32, i32, i32
  }
}

</mosaic_0001>

<llo_original>
// kernel: tpu_custom_call.1
$region0: #{tpu_custom_call.1}
  #allocation0 [shape = 'u32[]', space=smem, size = 0x4, offset = 0x4, fixed_abs, tag = 'smem constant byte address 0x4 - core index']
  #allocation1 [shape = 'u32[144,128]{1,0:T(1,128)}', space=vmem, size = 0x12000, scoped, tag = 'internal scratch']
  %s0 = inlined_call_operand.hbm [shape: f32[2,4,2,128], index: 0, kind: input, shape index: {}]
  %s1 = inlined_call_operand.vmem [shape: f32[4,1,1], index: 1, kind: input, shape index: {}]
  %s2 = inlined_call_operand.vmem [shape: f32[4,1,1], index: 2, kind: input, shape index: {}]
  %s3 = inlined_call_operand.hbm [shape: f32[2,4,2,128], index: 3, kind: output, shape index: {}]
  %s4 = sld [smem:[#allocation0]]
  $region49: #{tpu_custom_call.1} parent=0
    _
  %s6 = ssub.s32 1, %s4
  %s7 = scalar_select 0, %s6, %s4
  $region1: #{tpu_custom_call.1} parent=0
    #allocation2 [shape = 'u8[8192]{0}', space=vmem, size = 0x2000, scoped, tag = 'input window, operand 0']
    #allocation3 [shape = 's32[2]{0}', space=sflag, size = 0x8, scoped, tag = 'scoped memory for tpu_custom_call.1']
    #allocation4 [shape = 's32[2]{0}', space=sflag, size = 0x8, scoped, tag = 'scoped memory for tpu_custom_call.1']
    #allocation5 [shape = 'u8[8192]{0}', space=vmem, size = 0x2000, scoped, tag = 'output window, operand 0']
    %8 = vsyncpa [#allocation3], 0
    %s9 = scalar_lea.sflag [#allocation3], 1
    %10 = vsyncpa %s9, 0
    %11 = vsyncpa [#allocation4], 0
    %s12 = scalar_lea.sflag [#allocation4], 1
    %13 = vsyncpa %s12, 0
    loop: start=0, step=1, limit=4
    $region2: #{tpu_custom_call.1} parent=1 // loop_pre_header
      _
    $region3: #{tpu_custom_call.1} parent=1 // loop_header
      %s15 = sphi 0, %s19
      %p16 = scmp.ge.s32.totalorder %s15, 4
      %s22 = sphi 0, %s34
      %s23 = sphi 0, %s30
      %s24 = sphi 0, %s22
      %s25 = sphi 0, %s23
      %s26 = sphi 0, %s24
      %s27 = sphi 0, %s25
      %s39 = sphi 0, %s41
      %s42 = sphi 0, %s39
      %s43 = sphi 0, %s42
      %s59 = sphi 0, %s43
      %s63 = sphi 0, %s63
      %s65 = sphi 0, %s63
      %s66 = sphi 0, %s65
      %s80 = sphi 0, %s66
      %s84 = sphi 0, %s84
      %s86 = sphi 0, %s84
      %s87 = sphi 0, %s86
      %s101 = sphi 0, %s87
      %s109 = sphi 0, %s111
      %s112 = sphi 0, %s109
      %s113 = sphi 0, %s112
      %s129 = sphi 0, %s113
    $region4: #{tpu_custom_call.1} parent=1 // loop_header_branch
      %18 = sbr.rel (%p16) target = $region8
    $region5: #{tpu_custom_call.1} parent=1 // loop_body
      %s20 = ssub.s32 %s15, 1
      %s21 = ssub.s32 %s15, 2
      %s28 = sadd.s32 1, %s23
      %p29 = scmp.ge.s32.totalorder %s28, 1
      %s30 = scalar_select %p29, 0, %s28
      %s31 = sadd.s32 1, %s22
      %s32 = scalar_select %p29, %s31, %s22
      %p33 = scmp.ge.s32.totalorder %s32, 2
      %s34 = scalar_select %p33, 0, %s32
      %s35 = ssub.s32 %s22, %s34
      %s36 = ssub.s32 %s23, %s30
      %s37 = sor.u32 %s35, %s36
      %p38 = scmp.eq.s32.totalorder %s37, 0
      %s40 = sadd.s32 %s39, 1
      %s41 = scalar_select %p38, %s39, %s40
      %p44 = pneg %p38
      %p45 = scmp.eq.s32.totalorder %s15, 1
      %p46 = por %p44, %p45
      %p47 = scmp.ne.s32.totalorder %s39, %s42
      %p48 = scmp.eq.s32.totalorder %s15, 0
      %p49 = por %p47, %p48
      %p50 = scmp.ne.s32.totalorder %s39, %s42
      %p51 = scmp.eq.s32.totalorder %s20, 1
      %p52 = por %p50, %p51
      %p53 = scmp.ne.s32.totalorder %s42, %s43
      %p54 = scmp.eq.s32.totalorder %s20, 0
      %p55 = por %p53, %p54
      %p56 = scmp.ne.s32.totalorder %s42, %s43
      %p57 = scmp.eq.s32.totalorder %s21, 1
      %p58 = por %p56, %p57
      %p60 = scmp.ne.s32.totalorder %s43, %s59
      %p61 = scmp.eq.s32.totalorder %s21, 0
      %p62 = por %p60, %p61
      %s64 = sadd.s32 %s63, 1
      %p67 = scmp.eq.s32.totalorder %s15, 1
      %p68 = scmp.ne.s32.totalorder %s63, %s65
      %p69 = scmp.eq.s32.totalorder %s15, 0
      %p70 = por %p68, %p69
      %p71 = scmp.ne.s32.totalorder %s63, %s65
      %p72 = scmp.eq.s32.totalorder %s20, 1
      %p73 = por %p71, %p72
      %p74 = scmp.ne.s32.totalorder %s65, %s66
      %p75 = scmp.eq.s32.totalorder %s20, 0
      %p76 = por %p74, %p75
      %p77 = scmp.ne.s32.totalorder %s65, %s66
      %p78 = scmp.eq.s32.totalorder %s21, 1
      %p79 = por %p77, %p78
      %p81 = scmp.ne.s32.totalorder %s66, %s80
      %p82 = scmp.eq.s32.totalorder %s21, 0
      %p83 = por %p81, %p82
      %s85 = sadd.s32 %s84, 1
      %p88 = scmp.eq.s32.totalorder %s15, 1
      %p89 = scmp.ne.s32.totalorder %s84, %s86
      %p90 = scmp.eq.s32.totalorder %s15, 0
      %p91 = por %p89, %p90
      %p92 = scmp.ne.s32.totalorder %s84, %s86
      %p93 = scmp.eq.s32.totalorder %s20, 1
      %p94 = por %p92, %p93
      %p95 = scmp.ne.s32.totalorder %s86, %s87
      %p96 = scmp.eq.s32.totalorder %s20, 0
      %p97 = por %p95, %p96
      %p98 = scmp.ne.s32.totalorder %s86, %s87
      %p99 = scmp.eq.s32.totalorder %s21, 1
      %p100 = por %p98, %p99
      %p102 = scmp.ne.s32.totalorder %s87, %s101
      %p103 = scmp.eq.s32.totalorder %s21, 0
      %p104 = por %p102, %p103
      %s105 = ssub.s32 %s22, %s34
      %s106 = ssub.s32 %s23, %s30
      %s107 = sor.u32 %s105, %s106
      %p108 = scmp.eq.s32.totalorder %s107, 0
      %s110 = sadd.s32 %s109, 1
      %s111 = scalar_select %p108, %s109, %s110
      %p114 = pneg %p108
      %p115 = scmp.eq.s32.totalorder %s15, 1
      %p116 = por %p114, %p115
      %p117 = scmp.ne.s32.totalorder %s109, %s112
      %p118 = scmp.eq.s32.totalorder %s15, 0
      %p119 = por %p117, %p118
      %p120 = scmp.ne.s32.totalorder %s109, %s112
      %p121 = scmp.eq.s32.totalorder %s20, 1
      %p122 = por %p120, %p121
      %p123 = scmp.ne.s32.totalorder %s112, %s113
      %p124 = scmp.eq.s32.totalorder %s20, 0
      %p125 = por %p123, %p124
      %p126 = scmp.ne.s32.totalorder %s112, %s113
      %p127 = scmp.eq.s32.totalorder %s21, 1
      %p128 = por %p126, %p127
      %p130 = scmp.ne.s32.totalorder %s113, %s129
      %p131 = scmp.eq.s32.totalorder %s21, 0
      %p132 = por %p130, %p131
      %p133 = scmp.le.s32.totalorder 1, %s15
      %p134 = scmp.lt.s32.totalorder %s15, 3
      %p135 = pnand %p133, %p134
      %p136 = pneg %p135
      // Predicated region
      $region9: #{tpu_custom_call.1} parent=5 // pred_check
        _
      $region10: #{tpu_custom_call.1} parent=5 // pred_check_branch
        %138 = sbr.rel (%p135) target = $region12
      $region11: #{tpu_custom_call.1} parent=5 // pred_region
        %s139 = ssub.s32 %s15, 1
        // Predicated region
        $region13: #{tpu_custom_call.1} parent=11 // pred_check
          %p140 = pneg %p76
        $region14: #{tpu_custom_call.1} parent=11 // pred_check_branch
          %142 = sbr.rel (%p140) target = $region16
        $region15: #{tpu_custom_call.1} parent=11 // pred_region
          _
        $region16: #{tpu_custom_call.1} parent=11 // pred_fallthru
          _
        // Predicated region
        $region17: #{tpu_custom_call.1} parent=11 // pred_check
          %p143 = pneg %p97
        $region18: #{tpu_custom_call.1} parent=11 // pred_check_branch
          %145 = sbr.rel (%p143) target = $region20
        $region19: #{tpu_custom_call.1} parent=11 // pred_region
          _
        $region20: #{tpu_custom_call.1} parent=11 // pred_fallthru
          _
      $region12: #{tpu_custom_call.1} parent=5 // pred_fallthru
        _
      %p146 = scmp.lt.s32.totalorder %s15, 2
      // Predicated region
      $region21: #{tpu_custom_call.1} parent=5 // pred_check
        %p147 = pneg %p146
      $region22: #{tpu_custom_call.1} parent=5 // pred_check_branch
        %149 = sbr.rel (%p147) target = $region24
      $region23: #{tpu_custom_call.1} parent=5 // pred_region
        // Predicated region
        $region25: #{tpu_custom_call.1} parent=23 // pred_check
          %p150 = pneg %p49
        $region26: #{tpu_custom_call.1} parent=23 // pred_check_branch
          %152 = sbr.rel (%p150) target = $region28
        $region27: #{tpu_custom_call.1} parent=23 // pred_region
          %s153 = sand.u32 %s39, 1
          %s154 = scalar_lea.sflag [#allocation3], %s153
          %s155 = sand.u32 %s39, 1
          %s156 = smul.addr %s155, 8
          %s157 = scalar_lea.vmem [#allocation2], %s156
          %s159 = ssub.s32 128, 128
          %160 = vsyncadd %s154, %s159
          %s161 = smul.addr %s22, 4
          %s162 = sadd.s32 %s23, %s161
          %s163 = smul.addr %s162, 32
          %s164 = scalar_lea.hbm %s0, %s163
          %s165 = sshll.u32 %s157, 4
          %s166 = int_to_ptr.vmem [resolvable:$true] %s165
          %171 = dma.hbm_to_vmem [thread:$0]  %s164, 128, %s166, %s154, 32, 32, 2
        $region28: #{tpu_custom_call.1} parent=23 // pred_fallthru
          _
      $region24: #{tpu_custom_call.1} parent=5 // pred_fallthru
        _
      %p172 = scmp.le.s32.totalorder 1, %s15
      %p173 = scmp.lt.s32.totalorder %s15, 3
      %p174 = pnand %p172, %p173
      %p175 = pneg %p174
      // Predicated region
      $region29: #{tpu_custom_call.1} parent=5 // pred_check
        _
      $region30: #{tpu_custom_call.1} parent=5 // pred_check_branch
        %177 = sbr.rel (%p174) target = $region32
      $region31: #{tpu_custom_call.1} parent=5 // pred_region
        %s178 = ssub.s32 %s15, 1
        %s179 = sand.u32 %s42, 1
        %s180 = scalar_lea.sflag [#allocation3], %s179
        %s181 = sand.u32 %s42, 1
        %s182 = smul.addr %s181, 8
        %s183 = scalar_lea.vmem [#allocation2], %s182
        // Predicated region
        $region33: #{tpu_custom_call.1} parent=31 // pred_check
          %p184 = pneg %p55
        $region34: #{tpu_custom_call.1} parent=31 // pred_check_branch
          %186 = sbr.rel (%p184) target = $region36
        $region35: #{tpu_custom_call.1} parent=31 // pred_region
          %187 = dma.done %s180, 128
        $region36: #{tpu_custom_call.1} parent=31 // pred_fallthru
          _
        %s188 = sand.u32 %s42, 1
        %s189 = scalar_lea.sflag [#allocation3], %s188
        %s190 = sand.u32 %s42, 1
        %s191 = smul.addr %s190, 8
        %s192 = scalar_lea.vmem [#allocation2], %s191
        %p193 = pneg %p55
        %p194 = pneg %p52
        %p195 = pneg %p76
        %p196 = pneg %p73
        %p197 = pneg %p97
        %p198 = pneg %p94
        %p199 = pneg %p125
        %p200 = pneg %p122
        %s201 = sand.u32 %s112, 1
        %s202 = scalar_lea.sflag [#allocation4], %s201
        %s203 = sand.u32 %s112, 1
        %s204 = smul.addr %s203, 8
        %s205 = scalar_lea.vmem [#allocation5], %s204
        %v206 = vld [vmem:[%s183] sm:$0x3]
        %v207 = vld [vmem:[%s183 + $0x2] sm:$0x3]
        %v208 = vld [vmem:[%s183 + $0x4] sm:$0x3]
        %v209 = vld [vmem:[%s183 + $0x6] sm:$0x3]
        %vm210 = vcmask 1041408
        %v211 = vsel %vm210, %v206, 0.0
        %v212 = vsel %vm210, %v207, 0.0
        %v213 = vadd.f32 %v211, %v212
        %v214 = vsel %vm210, %v208, 0.0
        %v215 = vadd.f32 %v213, %v214
        %v216 = vsel %vm210, %v209, 0.0
        %v217 = vadd.f32 %v215, %v216
        %v218 = vmul.f32 %v206, %v206
        %v219 = vmul.f32 %v207, %v207
        %v220 = vmul.f32 %v208, %v208
        %v221 = vmul.f32 %v209, %v209
        %v222 = vsel %vm210, %v218, 0.0
        %v223 = vsel %vm210, %v219, 0.0
        %v224 = vadd.f32 %v222, %v223
        %v225 = vsel %vm210, %v220, 0.0
        %v226 = vadd.f32 %v224, %v225
        %v227 = vsel %vm210, %v221, 0.0
        %v228 = vadd.f32 %v226, %v227
        %v229 = vmul.f32 %v217, 0.25
        %v230 = vmul.f32 %v228, 0.25
        %v231 = vmul.f32 %v229, %v229
        %v232 = vsub.f32 %v230, %v231
        %v233 = vmax.f32 %v232, 0.0
        %v234 = vadd.f32 %v233, 1e-06
        %v235 = vrsqrt.pop %v234
        %v236 = vld [vmem:[%s1] sm:$0x1]
        %v237 = vld [vmem:[%s1 + $0x1] sm:$0x1]
        %v238 = vld [vmem:[%s1 + $0x2] sm:$0x1]
        %v239 = vld [vmem:[%s1 + $0x3] sm:$0x1]
        %v240 = vld [vmem:[%s2] sm:$0x1]
        %v241 = vld [vmem:[%s2 + $0x1] sm:$0x1]
        %v242 = vld [vmem:[%s2 + $0x2] sm:$0x1]
        %v243 = vld [vmem:[%s2 + $0x3] sm:$0x1]
        %v244 = vsub.f32 %v206, %v229
        %v245 = vsub.f32 %v207, %v229
        %v246 = vsub.f32 %v208, %v229
        %v247 = vsub.f32 %v209, %v229
        %v248 = vmul.f32 %v244, %v235
        %v249 = vmul.f32 %v245, %v235
        %v250 = vmul.f32 %v246, %v235
        %v251 = vmul.f32 %v247, %v235
        %v256 = vlaneseq
        %v257 = vshrl.u32 %v256, 7
        %v258 = vsub.s32 0, %v257
        %v259 = vrot.slane %v236, %v258
        %v260 = vlaneseq
        %v261 = vshrl.u32 %v260, 7
        %v262 = vsub.s32 0, %v261
        %v263 = vrot.slane %v237, %v262
        %v264 = vlaneseq
        %v265 = vshrl.u32 %v264, 7
        %v266 = vsub.s32 0, %v265
        %v267 = vrot.slane %v238, %v266
        %v268 = vlaneseq
        %v269 = vshrl.u32 %v268, 7
        %v270 = vsub.s32 0, %v269
        %v271 = vrot.slane %v239, %v270
        %272 = vset.pattern.permute.xlu0 0
        %273 = vperm.xlu0 %272, %v259
        %v274 = vpop.permute.xlu0 %273
        %276 = vset.pattern.permute.xlu0 0
        %277 = vperm.xlu0 %276, %v263
        %v278 = vpop.permute.xlu0 %277
        %280 = vset.pattern.permute.xlu0 0
        %281 = vperm.xlu0 %280, %v267
        %v282 = vpop.permute.xlu0 %281
        %284 = vset.pattern.permute.xlu0 0
        %285 = vperm.xlu0 %284, %v271
        %v286 = vpop.permute.xlu0 %285
        %v288 = vmul.f32 %v274, %v248
        %v289 = vmul.f32 %v278, %v249
        %v290 = vmul.f32 %v282, %v250
        %v291 = vmul.f32 %v286, %v251
        %v296 = vlaneseq
        %v297 = vshrl.u32 %v296, 7
        %v298 = vsub.s32 0, %v297
        %v299 = vrot.slane %v240, %v298
        %v300 = vlaneseq
        %v301 = vshrl.u32 %v300, 7
        %v302 = vsub.s32 0, %v301
        %v303 = vrot.slane %v241, %v302
        %v304 = vlaneseq
        %v305 = vshrl.u32 %v304, 7
        %v306 = vsub.s32 0, %v305
        %v307 = vrot.slane %v242, %v306
        %v308 = vlaneseq
        %v309 = vshrl.u32 %v308, 7
        %v310 = vsub.s32 0, %v309
        %v311 = vrot.slane %v243, %v310
        %312 = vset.pattern.permute.xlu0 0
        %313 = vperm.xlu0 %312, %v299
        %v314 = vpop.permute.xlu0 %313
        %316 = vset.pattern.permute.xlu0 0
        %317 = vperm.xlu0 %316, %v303
        %v318 = vpop.permute.xlu0 %317
        %320 = vset.pattern.permute.xlu0 0
        %321 = vperm.xlu0 %320, %v307
        %v322 = vpop.permute.xlu0 %321
        %324 = vset.pattern.permute.xlu0 0
        %325 = vperm.xlu0 %324, %v311
        %v326 = vpop.permute.xlu0 %325
        %v328 = vadd.f32 %v288, %v314
        %v329 = vadd.f32 %v289, %v318
        %v330 = vadd.f32 %v290, %v322
        %v331 = vadd.f32 %v291, %v326
        %332 = vst [vmem:[%s205] sm:$0x3] %v328
        %333 = vst [vmem:[%s205 + $0x2] sm:$0x3] %v329
        %334 = vst [vmem:[%s205 + $0x4] sm:$0x3] %v330
        %335 = vst [vmem:[%s205 + $0x6] sm:$0x3] %v331
        %s336 = sand.u32 %s112, 1
        %s337 = scalar_lea.sflag [#allocation4], %s336
        %s338 = sand.u32 %s112, 1
        %s339 = smul.addr %s338, 8
        %s340 = scalar_lea.vmem [#allocation5], %s339
        // Predicated region
        $region37: #{tpu_custom_call.1} parent=31 // pred_check
          %p341 = pneg %p122
        $region38: #{tpu_custom_call.1} parent=31 // pred_check_branch
          %343 = sbr.rel (%p341) target = $region40
        $region39: #{tpu_custom_call.1} parent=31 // pred_region
          %s345 = ssub.s32 128, 128
          %346 = vsyncadd %s337, %s345
          %s347 = smul.addr %s24, 4
          %s348 = sadd.s32 %s25, %s347
          %s349 = smul.addr %s348, 32
          %s350 = scalar_lea.hbm %s3, %s349
          %s351 = sshll.u32 %s340, 4
          %s352 = int_to_ptr.vmem [resolvable:$true] %s351
          %357 = dma.vmem_to_hbm [thread:$0]  %s352, 128, %s350, %s337, 32, 32, 2
        $region40: #{tpu_custom_call.1} parent=31 // pred_fallthru
          _
      $region32: #{tpu_custom_call.1} parent=5 // pred_fallthru
        _
      %p358 = scmp.le.s32.totalorder 2, %s15
      // Predicated region
      $region41: #{tpu_custom_call.1} parent=5 // pred_check
        %p359 = pneg %p358
      $region42: #{tpu_custom_call.1} parent=5 // pred_check_branch
        %361 = sbr.rel (%p359) target = $region44
      $region43: #{tpu_custom_call.1} parent=5 // pred_region
        %s362 = ssub.s32 %s15, 2
        // Predicated region
        $region45: #{tpu_custom_call.1} parent=43 // pred_check
          %p363 = pneg %p128
        $region46: #{tpu_custom_call.1} parent=43 // pred_check_branch
          %365 = sbr.rel (%p363) target = $region48
        $region47: #{tpu_custom_call.1} parent=43 // pred_region
          %s366 = sand.u32 %s113, 1
          %s367 = scalar_lea.sflag [#allocation4], %s366
          %s368 = sand.u32 %s113, 1
          %s369 = smul.addr %s368, 8
          %s370 = scalar_lea.vmem [#allocation5], %s369
          %371 = dma.done %s367, 128
        $region48: #{tpu_custom_call.1} parent=43 // pred_fallthru
          _
      $region44: #{tpu_custom_call.1} parent=5 // pred_fallthru
        _
    $region6: #{tpu_custom_call.1} parent=1 // loop_footer
      %s19 = sadd.s32 1, %s15
    $region7: #{tpu_custom_call.1} parent=1 // loop_footer_branch
      %14 = sbr.rel target = $region3
    $region8: #{tpu_custom_call.1} parent=1 // loop_exit
      _
    %372 = vsyncpa [#allocation3], 1
    %s373 = scalar_lea.sflag [#allocation3], 1
    %374 = vsyncpa %s373, 1
    %375 = vsyncpa [#allocation4], 1
    %s376 = scalar_lea.sflag [#allocation4], 1
    %377 = vsyncpa %s376, 1

</llo_original>
